<compile_context>
chip_gen: v7x
topology: tpu7x:2x2x1
jax: 0.10.0
libtpu: 0.0.40
codegen_flags: <defaults>
</compile_context>

<pallas_src>
import functools

import jax
import jax.numpy as jnp
from jax.experimental import pallas as pl
from jax.experimental.pallas import tpu as pltpu


def _leaky_relu_kernel(x_ref, o_ref, *, negative_slope):
    x = x_ref[...]
    # leaky_relu(x) = x if x >= 0 else negative_slope * x
    o_ref[...] = jnp.where(x >= 0, x, x * jnp.asarray(negative_slope, x.dtype))


def _leaky_relu_2d(x2d: jax.Array, negative_slope: float, sub: int) -> jax.Array:
    """Run the elementwise kernel over a (rows, lane) slab."""
    rows, lane = x2d.shape
    itemsize = jnp.dtype(x2d.dtype).itemsize

    # ~2 MiB blocks: big enough for ~85% of HBM roofline, small enough that
    # double-buffered in+out (4x block) fits every generation's scoped VMEM.
    target_block_bytes = 2 * 1024 * 1024
    max_rows = max(sub, (target_block_bytes // (lane * itemsize)) // sub * sub)

    if rows <= max_rows:
        # Single block covering the whole array (block dim == array dim is
        # always layout-legal, no masking needed).
        tile_rows = rows
        num_blocks = 1
    else:
        tile_rows = max_rows  # multiple of sub (>= 8); boundary block masked
        num_blocks = pl.cdiv(rows, tile_rows)
        if num_blocks > 1 and num_blocks % 2 == 1:
            # Prefer an even grid so v7x's two TensorCores split work evenly.
            tile_rows = max(sub, pl.cdiv(pl.cdiv(rows, num_blocks + 1), sub) * sub)
            num_blocks = pl.cdiv(rows, tile_rows)

    return pl.pallas_call(
        functools.partial(_leaky_relu_kernel, negative_slope=negative_slope),
        out_shape=jax.ShapeDtypeStruct((rows, lane), x2d.dtype),
        grid_spec=pltpu.PrefetchScalarGridSpec(
            num_scalar_prefetch=0,
            grid=(num_blocks,),
            in_specs=[pl.BlockSpec((tile_rows, lane), lambda i: (i, 0))],
            out_specs=pl.BlockSpec((tile_rows, lane), lambda i: (i, 0)),
        ),
        compiler_params=pltpu.CompilerParams(
            dimension_semantics=("parallel",),
        ),
    )(x2d)


def leaky_relu_pallas(x: jax.Array, negative_slope: float = 0.01) -> jax.Array:
    """Elementwise LeakyReLU on an arbitrary-shaped array via a Pallas kernel."""
    orig_shape = x.shape
    n = x.size
    if n == 0:
        return x

    itemsize = jnp.dtype(x.dtype).itemsize
    # Sublane packing granularity: 8 rows for 32-bit, 16 for 16-bit, 32 for 8-bit.
    sub = max(8, 32 // itemsize)

    # Pick the widest lane dim (multiple of 128) that divides numel exactly so
    # we can reshape without any padding / slicing (common conv/GAN shapes
    # divide by 2048 cleanly).
    lane = None
    for cand in (2048, 1024, 512, 256, 128):
        if n % cand == 0:
            lane = cand
            break

    if lane is not None:
        out2d = _leaky_relu_2d(x.reshape(n // lane, lane), negative_slope, sub)
        return out2d.reshape(orig_shape)

    # Fallback for numel not a multiple of 128: pad up to a 128-lane slab, then
    # slice back. This is the only path that pays an extra HBM copy.
    lane = 128
    n_pad = pl.cdiv(n, lane) * lane
    flat = jnp.pad(x.reshape(-1), (0, n_pad - n))
    out2d = _leaky_relu_2d(flat.reshape(n_pad // lane, lane), negative_slope, sub)
    return out2d.reshape(-1)[:n].reshape(orig_shape)


class LeakyReLU:
    """JAX/Pallas counterpart of the PyTorch LeakyReLU module."""

    def __init__(self, negative_slope: float = 0.01):
        self.negative_slope = negative_slope

    def __call__(self, x: jax.Array) -> jax.Array:
        return leaky_relu_pallas(x, self.negative_slope)

    def extra_repr(self) -> str:
        return f"LeakyReLU negative_slope={self.negative_slope}"


def _ref_leaky_relu(x, negative_slope):
    return jnp.where(x >= 0, x, x * jnp.asarray(negative_slope, x.dtype))


if __name__ == "__main__":
    key = jax.random.PRNGKey(0)

    # Main check: NCHW GAN-like input, f32.
    x = jax.random.normal(key, (2, 4, 16, 16), dtype=jnp.float32)
    module = LeakyReLU(negative_slope=0.01)
    y = jax.block_until_ready(module(x))
    y_ref = _ref_leaky_relu(x, 0.01)
    assert y.shape == x.shape and y.dtype == x.dtype
    assert jnp.allclose(y, y_ref, atol=1e-6, rtol=1e-6)

    # Ragged shape (numel not a multiple of 128) -> exercises the padded path.
    k1, k2 = jax.random.split(key)
    x_odd = jax.random.normal(k1, (3, 5, 7, 11), dtype=jnp.float32)
    y_odd = jax.block_until_ready(leaky_relu_pallas(x_odd, 0.1))
    assert jnp.allclose(y_odd, _ref_leaky_relu(x_odd, 0.1), atol=1e-6, rtol=1e-6)

    # bf16 path (16-row sublane granularity).
    x_bf = jax.random.normal(k2, (2, 4, 16, 16), dtype=jnp.bfloat16)
    y_bf = jax.block_until_ready(leaky_relu_pallas(x_bf, 0.2))
    assert y_bf.dtype == jnp.bfloat16
    assert jnp.allclose(
        y_bf.astype(jnp.float32),
        _ref_leaky_relu(x_bf, 0.2).astype(jnp.float32),
        atol=1e-2,
        rtol=1e-2,
    )

    print("KERNEL_OK")
</pallas_src>

<mosaic_0001>
module attributes {stable_mosaic.version = 11 : i64} {
  func.func @_leaky_relu_kernel(%arg0: i32, %arg1: memref<1x2048xf32, #tpu.memory_space<vmem>>, %arg2: memref<1x2048xf32, #tpu.memory_space<vmem>>) attributes {dimension_semantics = [#tpu.dimension_semantics<parallel>], iteration_bounds = array<i64: 1>, scalar_prefetch = 0 : i64, scratch_operands = 0 : i64, tpu.core_type = #tpu.core_type<tc>, window_params = [{transform_indices = @transform_0, window_bounds = array<i64: 1, 2048>}, {transform_indices = @transform_1, window_bounds = array<i64: 1, 2048>}]} {
    %c0 = arith.constant 0 : index
    %c0_0 = arith.constant 0 : index
    %0 = vector.load %arg1[%c0, %c0_0] : memref<1x2048xf32, #tpu.memory_space<vmem>>, vector<1x2048xf32>
    %cst = arith.constant 0.000000e+00 : f32
    %1 = vector.broadcast %cst : f32 to vector<1x2048xf32>
    %2 = arith.cmpf oge, %0, %1 : vector<1x2048xf32>
    %cst_1 = arith.constant 0.00999999977 : f32
    %3 = vector.broadcast %cst_1 : f32 to vector<1x2048xf32>
    %4 = arith.mulf %0, %3 : vector<1x2048xf32>
    %5 = arith.select %2, %0, %4 : vector<1x2048xi1>, vector<1x2048xf32>
    %c0_2 = arith.constant 0 : index
    %c0_3 = arith.constant 0 : index
    %6 = vector.load %arg2[%c0_2, %c0_3] : memref<1x2048xf32, #tpu.memory_space<vmem>>, vector<1x2048xf32>
    tpu.vector_store %arg2[%c0_2, %c0_3], %5 {strides = array<i32>} : memref<1x2048xf32, #tpu.memory_space<vmem>>, vector<1x2048xf32>,
    return
  }
  func.func @transform_0(%arg0: i32) -> (i32, i32) {
    %c0_i32 = arith.constant 0 : i32
    %c0_i32_0 = arith.constant 0 : i32
    return %arg0, %c0_i32 : i32, i32
  }
  func.func @transform_1(%arg0: i32) -> (i32, i32) {
    %c0_i32 = arith.constant 0 : i32
    %c0_i32_0 = arith.constant 0 : i32
    return %arg0, %c0_i32 : i32, i32
  }
}

</mosaic_0001>

<llo_original>
// kernel: tpu_custom_call.1
$region0: #{tpu_custom_call.1}
  #allocation0 [shape = 'u32[]', space=smem, size = 0x4, offset = 0x4, fixed_abs, tag = 'smem constant byte address 0x4 - core index']
  #allocation1 [shape = 'u32[144,128]{1,0:T(1,128)}', space=vmem, size = 0x12000, scoped, tag = 'internal scratch']
  %s0 = inlined_call_operand.hbm [shape: f32[1,2048], index: 0, kind: input, shape index: {}]
  %s1 = inlined_call_operand.hbm [shape: f32[1,2048], index: 1, kind: output, shape index: {}]
  %s2 = sld [smem:[#allocation0]]
  $region18: #{tpu_custom_call.1} parent=0
    _
  %s4 = ssub.s32 1, %s2
  %s5 = scalar_select 0, %s4, %s2
  $region1: #{tpu_custom_call.1} parent=0
    #allocation2 [shape = 'u8[8192]{0}', space=vmem, size = 0x2000, scoped, tag = 'input window, operand 0, single buffered']
    #allocation3 [shape = 's32[1]{0}', space=sflag, size = 0x4, scoped, tag = 'scoped memory for tpu_custom_call.1']
    #allocation4 [shape = 's32[1]{0}', space=sflag, size = 0x4, scoped, tag = 'scoped memory for tpu_custom_call.1']
    #allocation5 [shape = 'u8[8192]{0}', space=vmem, size = 0x2000, scoped, tag = 'output window, operand 0, single buffered']
    %6 = vsyncpa [#allocation3], 0
    %7 = vsyncpa [#allocation4], 0
    // Predicated region
    $region2: #{tpu_custom_call.1} parent=1 // pred_check
      _
    $region3: #{tpu_custom_call.1} parent=1 // pred_check_branch
      %9 = sbr.rel (0) target = $region5
    $region4: #{tpu_custom_call.1} parent=1 // pred_region
      %s11 = ssub.s32 256, 256
      %12 = vsyncadd [#allocation3], %s11
      %s14 = sshll.u32 [#allocation2], 4
      %s15 = int_to_ptr.vmem [resolvable:$true] %s14
      %17 = dma.hbm_to_vmem [thread:$0]  %s0, 256, %s15, [#allocation3]
    $region5: #{tpu_custom_call.1} parent=1 // pred_fallthru
      _
    // Predicated region
    $region6: #{tpu_custom_call.1} parent=1 // pred_check
      _
    $region7: #{tpu_custom_call.1} parent=1 // pred_check_branch
      %19 = sbr.rel (0) target = $region9
    $region8: #{tpu_custom_call.1} parent=1 // pred_region
      %20 = dma.done [#allocation3], 256
    $region9: #{tpu_custom_call.1} parent=1 // pred_fallthru
      _
    %v21 = vld [vmem:[#allocation2] sm:$0xff]
    %v22 = vld [vmem:[#allocation2 + $0x8] sm:$0xff]
    %vm23 = vcmp.ge.f32.partialorder %v21, 0.0
    %vm24 = vcmp.ge.f32.partialorder %v22, 0.0
    %v25 = vmul.f32 %v21, 0.01
    %v26 = vmul.f32 %v22, 0.01
    %v27 = vsel %vm23, %v21, %v25
    %v28 = vsel %vm24, %v22, %v26
    %29 = vst [vmem:[#allocation5] sm:$0xff] %v27
    %30 = vst [vmem:[#allocation5 + $0x8] sm:$0xff] %v28
    // Predicated region
    $region10: #{tpu_custom_call.1} parent=1 // pred_check
      _
    $region11: #{tpu_custom_call.1} parent=1 // pred_check_branch
      %32 = sbr.rel (0) target = $region13
    $region12: #{tpu_custom_call.1} parent=1 // pred_region
      %s34 = ssub.s32 256, 256
      %35 = vsyncadd [#allocation4], %s34
      %s37 = sshll.u32 [#allocation5], 4
      %s38 = int_to_ptr.vmem [resolvable:$true] %s37
      %40 = dma.vmem_to_hbm [thread:$0]  %s38, 256, %s1, [#allocation4]
    $region13: #{tpu_custom_call.1} parent=1 // pred_fallthru
      _
    // Predicated region
    $region14: #{tpu_custom_call.1} parent=1 // pred_check
      _
    $region15: #{tpu_custom_call.1} parent=1 // pred_check_branch
      %42 = sbr.rel (0) target = $region17
    $region16: #{tpu_custom_call.1} parent=1 // pred_region
      %43 = dma.done [#allocation4], 256
    $region17: #{tpu_custom_call.1} parent=1 // pred_fallthru
      _
    %44 = vsyncpa [#allocation3], 1
    %45 = vsyncpa [#allocation4], 1

</llo_original>
